<compile_context>
chip_gen: v6e
topology: v6e:2x2x1
jax: 0.10.0
libtpu: 0.0.40
codegen_flags: <defaults>
</compile_context>

<pallas_src>
import functools

import jax
import jax.numpy as jnp
from jax.experimental import pallas as pl
from jax.experimental.pallas import tpu as pltpu

LANES = 128
SUBLANES = 8
TILE_R_MAX = 4096          # 4096 * 128 * 4B = 2 MiB per f32 input block


def _cdiv(a, b):
    return -(-a // b)


def _round_up(a, m):
    return _cdiv(a, m) * m


def _bce_elem(x, y):
    # Numerically-stable BCE with logits (matches torch.nn.BCEWithLogitsLoss):
    #   max(x, 0) - x*y + log(1 + exp(-|x|))
    return jnp.maximum(x, 0.0) - x * y + jnp.log1p(jnp.exp(-jnp.abs(x)))


def _bce_sum_kernel(x_ref, y_ref, o_ref, *, rows, tile_r, tiles_per_core):
    c = pl.program_id(0)   # core-split index   ("parallel")
    i = pl.program_id(1)   # row-tile index within this core ("arbitrary")

    @pl.when(i == 0)
    def _():
        o_ref[...] = jnp.zeros_like(o_ref)

    x = x_ref[...].astype(jnp.float32)
    y = y_ref[...].astype(jnp.float32)
    bce = _bce_elem(x, y)

    # Mask rows beyond the logical array (ragged last tile / phantom tiles of
    # the core split). OOB block contents are unspecified, so select (where),
    # never multiply, to avoid NaN/Inf leakage.
    row_start = (c * tiles_per_core + i) * tile_r
    row_idx = row_start + jax.lax.broadcasted_iota(jnp.int32, (tile_r, LANES), 0)
    bce = jnp.where(row_idx < rows, bce, 0.0)

    # Fold sublane groups of 8 and accumulate into the resident (8,128)
    # output block; the single cross-lane/cross-sublane reduce happens once,
    # outside the kernel.
    partial = jnp.sum(bce.reshape(tile_r // SUBLANES, SUBLANES, LANES), axis=0)
    o_ref[...] += partial


def binary_focal_loss_with_logits(inputs, targets, alpha=0.25, gamma=2.0,
                                  reduction=True):
    x = inputs.reshape(-1)
    y = targets.reshape(-1)
    n = x.shape[0]

    n_main = (n // LANES) * LANES
    rows = n_main // LANES
    tail = n - n_main

    # Sub-128-element flat tail: negligible, done in plain JAX (avoids padded
    # full-array copies in the wrapper).
    if tail > 0:
        xt = x[n_main:].astype(jnp.float32)
        yt = y[n_main:].astype(jnp.float32)
        tail_sum = jnp.sum(_bce_elem(xt, yt))
    else:
        tail_sum = jnp.float32(0.0)

    if rows > 0:
        x2d = (x if tail == 0 else x[:n_main]).reshape(rows, LANES)
        y2d = (y if tail == 0 else y[:n_main]).reshape(rows, LANES)

        tile_r = min(TILE_R_MAX, _round_up(rows, SUBLANES))
        tiles_total = _cdiv(rows, tile_r)
        split = 2 if tiles_total >= 2 else 1   # 2 TCs on v7x; harmless on v5e/v6e
        tiles_per_core = _cdiv(tiles_total, split)

        def in_map(c, i):
            blk = c * tiles_per_core + i
            # Clamp phantom tiles (odd tile counts) onto the last real tile;
            # the kernel masks them out via the logical row index.
            return (jnp.minimum(blk, tiles_total - 1), 0)

        kernel = functools.partial(
            _bce_sum_kernel, rows=rows, tile_r=tile_r,
            tiles_per_core=tiles_per_core)

        bytes_in = (x2d.size * x2d.dtype.itemsize
                    + y2d.size * y2d.dtype.itemsize)

        partials = pl.pallas_call(
            kernel,
            out_shape=jax.ShapeDtypeStruct((split * SUBLANES, LANES),
                                           jnp.float32),
            grid_spec=pltpu.PrefetchScalarGridSpec(
                num_scalar_prefetch=0,
                grid=(split, tiles_per_core),
                in_specs=[
                    pl.BlockSpec((tile_r, LANES), in_map),
                    pl.BlockSpec((tile_r, LANES), in_map),
                ],
                out_specs=pl.BlockSpec((SUBLANES, LANES), lambda c, i: (c, 0)),
            ),
            compiler_params=pltpu.CompilerParams(
                dimension_semantics=("parallel", "arbitrary"),
                vmem_limit_bytes=32 * 1024 * 1024),
            cost_estimate=pl.CostEstimate(
                flops=8 * n_main,
                transcendentals=2 * n_main,
                bytes_accessed=bytes_in + split * SUBLANES * LANES * 4),
        )(x2d, y2d)
        kernel_sum = jnp.sum(partials)
    else:
        kernel_sum = jnp.float32(0.0)

    mean_bce = (kernel_sum + tail_sum) / jnp.float32(n)
    bce_exp = jnp.exp(-mean_bce)
    focal = jnp.float32(alpha) * (1.0 - bce_exp) ** jnp.float32(gamma) * mean_bce
    # `reduction` flag is numerically a no-op: the focal loss is already scalar.
    return focal


def _reference(inputs, targets, alpha=0.25, gamma=2.0):
    x = inputs.reshape(-1).astype(jnp.float32)
    y = targets.reshape(-1).astype(jnp.float32)
    bce = jnp.mean(_bce_elem(x, y))
    return alpha * (1.0 - jnp.exp(-bce)) ** gamma * bce


if __name__ == "__main__":
    key = jax.random.PRNGKey(0)
    k1, k2 = jax.random.split(key)
    # NCHW-shaped logits and binary targets (the module flattens them anyway).
    x = jax.random.normal(k1, (2, 4, 16, 16), dtype=jnp.float32)
    y = (jax.random.uniform(k2, (2, 4, 16, 16)) > 0.5).astype(jnp.float32)

    loss = binary_focal_loss_with_logits(x, y, alpha=0.25, gamma=2.0,
                                         reduction=True)
    loss = jax.block_until_ready(loss)

    ref = _reference(x, y)
    assert jnp.allclose(loss, ref, rtol=1e-5, atol=1e-6), (loss, ref)
    print("KERNEL_OK")
</pallas_src>

<mosaic_0001>
module attributes {stable_mosaic.version = 11 : i64} {
  func.func @_bce_sum_kernel(%arg0: i32, %arg1: i32, %arg2: memref<16x128xf32, #tpu.memory_space<vmem>>, %arg3: memref<16x128xf32, #tpu.memory_space<vmem>>, %arg4: memref<8x128xf32, #tpu.memory_space<vmem>>) attributes {dimension_semantics = [#tpu.dimension_semantics<parallel>, #tpu.dimension_semantics<arbitrary>], iteration_bounds = array<i64: 1, 1>, scalar_prefetch = 0 : i64, scratch_operands = 0 : i64, tpu.core_type = #tpu.core_type<tc>, window_params = [{transform_indices = @transform_0, window_bounds = array<i64: 16, 128>}, {transform_indices = @transform_1, window_bounds = array<i64: 16, 128>}, {transform_indices = @transform_2, window_bounds = array<i64: 8, 128>}]} {
    %c0_i32 = arith.constant 0 : i32
    %0 = arith.cmpi eq, %arg1, %c0_i32 : i32
    %1 = arith.extui %0 : i1 to i32
    %c0_i32_0 = arith.constant 0 : i32
    %2 = arith.cmpi ne, %1, %c0_i32_0 : i32
    scf.if %2 {
      %cst_12 = arith.constant 0.000000e+00 : f32
      %30 = vector.broadcast %cst_12 : f32 to vector<8x128xf32>
      %c0_13 = arith.constant 0 : index
      %c0_14 = arith.constant 0 : index
      %31 = vector.load %arg4[%c0_13, %c0_14] : memref<8x128xf32, #tpu.memory_space<vmem>>, vector<8x128xf32>
      tpu.vector_store %arg4[%c0_13, %c0_14], %30 {strides = array<i32>} : memref<8x128xf32, #tpu.memory_space<vmem>>, vector<8x128xf32>,
    } else {
    }
    %c0 = arith.constant 0 : index
    %c0_1 = arith.constant 0 : index
    %3 = vector.load %arg2[%c0, %c0_1] : memref<16x128xf32, #tpu.memory_space<vmem>>, vector<16x128xf32>
    %c0_2 = arith.constant 0 : index
    %c0_3 = arith.constant 0 : index
    %4 = vector.load %arg3[%c0_2, %c0_3] : memref<16x128xf32, #tpu.memory_space<vmem>>, vector<16x128xf32>
    %cst = arith.constant 0.000000e+00 : f32
    %5 = vector.broadcast %cst : f32 to vector<16x128xf32>
    %6 = arith.maximumf %3, %5 : vector<16x128xf32>
    %7 = arith.mulf %3, %4 : vector<16x128xf32>
    %8 = arith.subf %6, %7 : vector<16x128xf32>
    %9 = math.absf %3 : vector<16x128xf32>
    %cst_4 = arith.constant 0.000000e+00 : f32
    %10 = vector.broadcast %cst_4 : f32 to vector<16x128xf32>
    %11 = arith.subf %10, %9 : vector<16x128xf32>
    %12 = math.exp %11 : vector<16x128xf32>
    %13 = math.log1p %12 : vector<16x128xf32>
    %14 = arith.addf %8, %13 : vector<16x128xf32>
    %c1_i32 = arith.constant 1 : i32
    %15 = arith.muli %arg0, %c1_i32 : i32
    %16 = arith.addi %15, %arg1 : i32
    %c16_i32 = arith.constant 16 : i32
    %17 = arith.muli %16, %c16_i32 : i32
    %18 = tpu.iota {dimensions = array<i32: 0>} : vector<16x128xi32>
    %19 = vector.broadcast %17 : i32 to vector<16x128xi32>
    %20 = arith.addi %19, %18 : vector<16x128xi32>
    %c16_i32_5 = arith.constant 16 : i32
    %21 = vector.broadcast %c16_i32_5 : i32 to vector<16x128xi32>
    %22 = arith.cmpi slt, %20, %21 : vector<16x128xi32>
    %cst_6 = arith.constant 0.000000e+00 : f32
    %23 = vector.broadcast %cst_6 : f32 to vector<16x128xf32>
    %24 = arith.select %22, %14, %23 : vector<16x128xi1>, vector<16x128xf32>
    %25 = vector.shape_cast %24 : vector<16x128xf32> to vector<2x8x128xf32>
    %cst_7 = arith.constant dense<0.000000e+00> : vector<8x128xf32>
    %26 = vector.multi_reduction <add>, %25, %cst_7 [0] : vector<2x8x128xf32> to vector<8x128xf32>
    %c0_8 = arith.constant 0 : index
    %c0_9 = arith.constant 0 : index
    %27 = vector.load %arg4[%c0_8, %c0_9] : memref<8x128xf32, #tpu.memory_space<vmem>>, vector<8x128xf32>
    %28 = arith.addf %27, %26 : vector<8x128xf32>
    %c0_10 = arith.constant 0 : index
    %c0_11 = arith.constant 0 : index
    %29 = vector.load %arg4[%c0_10, %c0_11] : memref<8x128xf32, #tpu.memory_space<vmem>>, vector<8x128xf32>
    tpu.vector_store %arg4[%c0_10, %c0_11], %28 {strides = array<i32>} : memref<8x128xf32, #tpu.memory_space<vmem>>, vector<8x128xf32>,
    return
  }
  func.func @transform_0(%arg0: i32, %arg1: i32) -> (i32, i32) {
    %c1_i32 = arith.constant 1 : i32
    %0 = arith.muli %arg0, %c1_i32 : i32
    %1 = arith.addi %0, %arg1 : i32
    %c0_i32 = arith.constant 0 : i32
    %2 = arith.minsi %1, %c0_i32 : i32
    %c0_i32_0 = arith.constant 0 : i32
    %c0_i32_1 = arith.constant 0 : i32
    return %2, %c0_i32_0 : i32, i32
  }
  func.func @transform_1(%arg0: i32, %arg1: i32) -> (i32, i32) {
    %c1_i32 = arith.constant 1 : i32
    %0 = arith.muli %arg0, %c1_i32 : i32
    %1 = arith.addi %0, %arg1 : i32
    %c0_i32 = arith.constant 0 : i32
    %2 = arith.minsi %1, %c0_i32 : i32
    %c0_i32_0 = arith.constant 0 : i32
    %c0_i32_1 = arith.constant 0 : i32
    return %2, %c0_i32_0 : i32, i32
  }
  func.func @transform_2(%arg0: i32, %arg1: i32) -> (i32, i32) {
    %c0_i32 = arith.constant 0 : i32
    %c0_i32_0 = arith.constant 0 : i32
    return %arg0, %c0_i32 : i32, i32
  }
}

</mosaic_0001>

<llo_original>
// kernel: tpu_custom_call.1
$region0: #{tpu_custom_call.1}
  #allocation0 [shape = 'u32[]', space=smem, size = 0x4, offset = 0x4, fixed_abs, tag = 'smem constant byte address 0x4 - core index']
  #allocation1 [shape = 'u32[144,128]{1,0:T(1,128)}', space=vmem, size = 0x12000, scoped, tag = 'internal scratch']
  %s0 = inlined_call_operand.hbm [shape: f32[16,128], index: 0, kind: input, shape index: {}]
  %s1 = inlined_call_operand.hbm [shape: f32[16,128], index: 1, kind: input, shape index: {}]
  %s2 = inlined_call_operand.hbm [shape: f32[8,128], index: 2, kind: output, shape index: {}]
  %s3 = sld [smem:[#allocation0]]
  $region30: #{tpu_custom_call.1} parent=0
    _
  %s5 = ssub.s32 1, %s3
  %s6 = scalar_select 0, %s5, %s3
  $region1: #{tpu_custom_call.1} parent=0
    #allocation2 [shape = 'u8[8192]{0}', space=vmem, size = 0x2000, scoped, tag = 'input window, operand 0, single buffered']
    #allocation3 [shape = 's32[1]{0}', space=sflag, size = 0x4, scoped, tag = 'scoped memory for tpu_custom_call.1']
    #allocation4 [shape = 's32[1]{0}', space=sflag, size = 0x4, scoped, tag = 'scoped memory for tpu_custom_call.1']
    #allocation5 [shape = 'u8[8192]{0}', space=vmem, size = 0x2000, scoped, tag = 'input window, operand 1, single buffered']
    #allocation6 [shape = 's32[1]{0}', space=sflag, size = 0x4, scoped, tag = 'scoped memory for tpu_custom_call.1']
    #allocation7 [shape = 'u8[4096]{0}', space=vmem, size = 0x1000, scoped, tag = 'output window, operand 0, single buffered']
    %7 = vsyncpa [#allocation3], 0
    %8 = vsyncpa [#allocation6], 0
    %9 = vsyncpa [#allocation4], 0
    // Predicated region
    $region2: #{tpu_custom_call.1} parent=1 // pred_check
      _
    $region3: #{tpu_custom_call.1} parent=1 // pred_check_branch
      %11 = sbr.rel (0) target = $region5
    $region4: #{tpu_custom_call.1} parent=1 // pred_region
      %s12 = sadd.s32 0, 0
      %p13 = scmp.lt.s32.totalorder %s12, 0
      %s14 = scalar_select %p13, %s12, 0
      %s15 = smul.u32 2, %s14
      %s17 = ssub.s32 256, 256
      %18 = vsyncadd [#allocation3], %s17
      %s19 = smul.addr %s15, 128
      %s20 = scalar_lea.hbm %s0, %s19
      %s21 = sshll.u32 [#allocation2], 4
      %s22 = int_to_ptr.vmem [resolvable:$true] %s21
      %27 = dma.hbm_to_vmem [thread:$0]  %s20, 256, %s22, [#allocation3], 128, 128, 8
    $region5: #{tpu_custom_call.1} parent=1 // pred_fallthru
      _
    // Predicated region
    $region6: #{tpu_custom_call.1} parent=1 // pred_check
      _
    $region7: #{tpu_custom_call.1} parent=1 // pred_check_branch
      %29 = sbr.rel (0) target = $region9
    $region8: #{tpu_custom_call.1} parent=1 // pred_region
      %s30 = sadd.s32 0, 0
      %p31 = scmp.lt.s32.totalorder %s30, 0
      %s32 = scalar_select %p31, %s30, 0
      %s33 = smul.u32 2, %s32
      %s35 = ssub.s32 256, 256
      %36 = vsyncadd [#allocation6], %s35
      %s37 = smul.addr %s33, 128
      %s38 = scalar_lea.hbm %s1, %s37
      %s39 = sshll.u32 [#allocation5], 4
      %s40 = int_to_ptr.vmem [resolvable:$true] %s39
      %45 = dma.hbm_to_vmem [thread:$0]  %s38, 256, %s40, [#allocation6], 128, 128, 8
    $region9: #{tpu_custom_call.1} parent=1 // pred_fallthru
      _
    // Predicated region
    $region10: #{tpu_custom_call.1} parent=1 // pred_check
      _
    $region11: #{tpu_custom_call.1} parent=1 // pred_check_branch
      %47 = sbr.rel (0) target = $region13
    $region12: #{tpu_custom_call.1} parent=1 // pred_region
      %48 = dma.done [#allocation3], 256
    $region13: #{tpu_custom_call.1} parent=1 // pred_fallthru
      _
    // Predicated region
    $region14: #{tpu_custom_call.1} parent=1 // pred_check
      _
    $region15: #{tpu_custom_call.1} parent=1 // pred_check_branch
      %50 = sbr.rel (0) target = $region17
    $region16: #{tpu_custom_call.1} parent=1 // pred_region
      %51 = dma.done [#allocation6], 256
    $region17: #{tpu_custom_call.1} parent=1 // pred_fallthru
      _
    %s52 = sadd.s32 0, 0
    %p53 = scmp.lt.s32.totalorder %s52, 0
    %s54 = scalar_select %p53, %s52, 0
    %s55 = smul.u32 2, %s54
    %s56 = sadd.s32 0, 0
    %p57 = scmp.lt.s32.totalorder %s56, 0
    %s58 = scalar_select %p57, %s56, 0
    %s59 = smul.u32 2, %s58
    %p60 = scmp.eq.s32.totalorder 0, 0
    // Predicated region
    $region18: #{tpu_custom_call.1} parent=1 // pred_check
      %p61 = pneg %p60
    $region19: #{tpu_custom_call.1} parent=1 // pred_check_branch
      %63 = sbr.rel (%p61) target = $region21
    $region20: #{tpu_custom_call.1} parent=1 // pred_region
      %64 = vst [vmem:[#allocation7] sm:$0xff] 0.0
    $region21: #{tpu_custom_call.1} parent=1 // pred_fallthru
      _
    %v65 = vld [vmem:[#allocation2] sm:$0xff]
    %v66 = vld [vmem:[#allocation2 + $0x8] sm:$0xff]
    %v67 = vld [vmem:[#allocation5] sm:$0xff]
    %v68 = vld [vmem:[#allocation5 + $0x8] sm:$0xff]
    %v69 = vmax.f32 %v65, 0.0
    %v70 = vmax.f32 %v66, 0.0
    %v71 = vmul.f32 %v65, %v67
    %v72 = vmul.f32 %v66, %v68
    %v73 = vsub.f32 %v69, %v71
    %v74 = vsub.f32 %v70, %v72
    %v75 = vand.u32 2147483647, %v65
    %v76 = vand.u32 2147483647, %v66
    %v77 = vsub.f32 0.0, %v75
    %v78 = vsub.f32 0.0, %v76
    %v79 = vmul.f32 %v77, 1.442695
    %v80 = vpow.pop %v79
    %v81 = vmul.f32 %v78, 1.442695
    %v82 = vpow.pop %v81
    %v83 = vadd.f32 %v80, 1.0
    %v84 = vlog2.pop %v83
    %v85 = vmul.f32 %v84, 0.6931472
    %v86 = vmul.f32 -0.5, %v80
    %v87 = vadd.f32 %v86, 1.0
    %v88 = vmul.f32 %v87, %v80
    %v89 = vand.u32 2147483647, %v80
    %vm90 = vcmp.lt.f32.partialorder %v89, 0.0004427343
    %v91 = vsel %vm90, %v88, %v85
    %v92 = vadd.f32 %v82, 1.0
    %v93 = vlog2.pop %v92
    %v94 = vmul.f32 %v93, 0.6931472
    %v95 = vmul.f32 -0.5, %v82
    %v96 = vadd.f32 %v95, 1.0
    %v97 = vmul.f32 %v96, %v82
    %v98 = vand.u32 2147483647, %v82
    %vm99 = vcmp.lt.f32.partialorder %v98, 0.0004427343
    %v100 = vsel %vm99, %v97, %v94
    %v101 = vadd.f32 %v73, %v91
    %v102 = vadd.f32 %v74, %v100
    %s103 = sadd.s32 0, 0
    %s104 = smul.u32 %s103, 16
    %v105 = vlaneseq
    %v106 = vshrl.u32 %v105, 7
    %v107 = vadd.s32 %v106, 8
    %v108 = vstv %s104
    %v109 = vadd.s32 %v108, %v106
    %v110 = vadd.s32 %v108, %v107
    %vm111 = vcmp.lt.s32.totalorder %v109, 16
    %vm112 = vcmp.lt.s32.totalorder %v110, 16
    %v113 = vsel %vm111, %v101, 0.0
    %v114 = vsel %vm112, %v102, 0.0
    %v115 = vadd.f32 %v113, %v114
    %v116 = vld [vmem:[#allocation7] sm:$0xff]
    %v117 = vadd.f32 %v116, %v115
    %118 = vst [vmem:[#allocation7] sm:$0xff] %v117
    // Predicated region
    $region22: #{tpu_custom_call.1} parent=1 // pred_check
      _
    $region23: #{tpu_custom_call.1} parent=1 // pred_check_branch
      %120 = sbr.rel (0) target = $region25
    $region24: #{tpu_custom_call.1} parent=1 // pred_region
      %s122 = ssub.s32 128, 128
      %123 = vsyncadd [#allocation4], %s122
      %s125 = sshll.u32 [#allocation7], 4
      %s126 = int_to_ptr.vmem [resolvable:$true] %s125
      %128 = dma.vmem_to_hbm [thread:$0]  %s126, 128, %s2, [#allocation4]
    $region25: #{tpu_custom_call.1} parent=1 // pred_fallthru
      _
    // Predicated region
    $region26: #{tpu_custom_call.1} parent=1 // pred_check
      _
    $region27: #{tpu_custom_call.1} parent=1 // pred_check_branch
      %130 = sbr.rel (0) target = $region29
    $region28: #{tpu_custom_call.1} parent=1 // pred_region
      %131 = dma.done [#allocation4], 128
    $region29: #{tpu_custom_call.1} parent=1 // pred_fallthru
      _
    %132 = vsyncpa [#allocation3], 1
    %133 = vsyncpa [#allocation6], 1
    %134 = vsyncpa [#allocation4], 1

</llo_original>
